<compile_context>
chip_gen: v5e
topology: v5e:2x2
jax: 0.10.0
libtpu: 0.0.40
codegen_flags: <defaults>
</compile_context>

<pallas_src>
import jax
import jax.numpy as jnp
from jax import lax
from jax.experimental import pallas as pl
from jax.experimental.pallas import tpu as pltpu

_LANE = 128


def _residual_kernel(x_ref, t_ref, w_ref, o_ref):
    # x_ref: (1, C, T)      spatial tile of one batch element; channels on sublanes,
    #                       spatial positions on lanes (T is a multiple of 128 or == HW)
    # t_ref: (1, C, 1)      per-sample (time embedding + conv bias), f32, lane-broadcast
    # w_ref: (C_out, C_in)  pre-transposed 1x1-conv weight (resident)
    x = x_ref[0]                                               # (C, T)
    # y[d, p] = sum_c w[c, d] * x[c, p]   (contraction over input channels)
    y = lax.dot_general(
        w_ref[...], x,
        dimension_numbers=(((1,), (0,)), ((), ())),
        preferred_element_type=jnp.float32,
    )                                                          # (C, T) f32
    # fn(x, t) + x, all adds in f32, single cast at the store.
    o_ref[0] = (y + t_ref[0] + x).astype(o_ref.dtype)


def _vmem_capacity_bytes():
    """Trace-time VMEM capacity; conservative (v7x-sized) fallback if unavailable."""
    try:
        info = pltpu.get_tpu_info()
        cap = int(getattr(info, "vmem_capacity_bytes", 0) or 0)
        if cap > 0:
            return cap
    except Exception:
        pass
    return 64 * 1024 * 1024


def _pick_tile_hw(HW, C, itemsize, B, vmem_cap):
    """Spatial tile (lane dim). Multiple of 128 (lane-dense stores) unless HW <= 128.

    Budget: in + out tiles are each double-buffered -> 4 live (C, tile) buffers plus
    tiny residents (w, t). Per-buffer budget scales with the generation's VMEM:
    ~8 MiB on v5e/v6e (128 MiB VMEM), ~4 MiB on v7x (64 MiB VMEM).
    Also keep >= ~8 grid steps total so the BlockSpec pipeline stays overlapped.
    """
    if HW <= _LANE:
        return HW  # full-extent last dim is always legal

    per_buf = max(2 << 20, min(8 << 20, vmem_cap // 16))
    vmem_rows = max(_LANE, (per_buf // (C * itemsize)) // _LANE * _LANE)

    min_steps = 8
    tiles_per_batch = -(-min_steps // max(B, 1))               # ceil
    pipe_rows = max(_LANE, (HW // tiles_per_batch) // _LANE * _LANE)

    tile = min(vmem_rows, pipe_rows)
    tile = min(tile, -(-HW // _LANE) * _LANE)                  # <= lane-padded extent
    return max(_LANE, tile)


def residual_forward(x_nchw, t_emb, w, b):
    """Residual(fn): out = fn(x, t) + x with fn = 1x1 conv (w, b) + time broadcast.

    x_nchw: (B, C, H, W)   (PyTorch layout)
    t_emb : (B, C)
    w     : (C_in, C_out)  (contracted over input channels, as in einsum 'bchw,cd->bdhw')
    b     : (C_out,)
    """
    B, C, H, W = x_nchw.shape
    HW = H * W

    # Free reshapes only — stay in (B, C, HW) layout end to end.
    x = x_nchw.reshape(B, C, HW)
    # Fold the conv bias into the per-sample time embedding (exact: y + b + t == y + (t+b)).
    t3 = (t_emb.astype(jnp.float32) + b.astype(jnp.float32)[None, :]).reshape(B, C, 1)
    wt = jnp.transpose(w)                                      # (C_out, C_in), once

    vmem_cap = _vmem_capacity_bytes()
    tile_hw = _pick_tile_hw(HW, C, x.dtype.itemsize, B, vmem_cap)
    n_tiles = pl.cdiv(HW, tile_hw)                             # last block masked if partial

    tile_bytes = C * tile_hw * x.dtype.itemsize
    # Working set ~= 4 * tile_bytes (double-buffered in/out) + residents; leave headroom
    # but never ask for more than 3/4 of this generation's physical VMEM.
    vmem_limit = int(min(vmem_cap * 3 // 4,
                         max(6 * tile_bytes + (4 << 20), 16 << 20)))

    out = pl.pallas_call(
        _residual_kernel,
        out_shape=jax.ShapeDtypeStruct((B, C, HW), x.dtype),
        grid_spec=pltpu.PrefetchScalarGridSpec(
            num_scalar_prefetch=0,
            grid=(B, n_tiles),
            in_specs=[
                pl.BlockSpec((1, C, tile_hw), lambda bi, ri: (bi, 0, ri)),  # x tile
                pl.BlockSpec((1, C, 1), lambda bi, ri: (bi, 0, 0)),         # t+b (per-batch resident)
                pl.BlockSpec((C, C), lambda bi, ri: (0, 0)),                # w (resident)
            ],
            out_specs=pl.BlockSpec((1, C, tile_hw), lambda bi, ri: (bi, 0, ri)),
        ),
        compiler_params=pltpu.CompilerParams(
            dimension_semantics=("parallel", "parallel"),
            vmem_limit_bytes=vmem_limit,
        ),
    )(x, t3, wt)

    return out.reshape(B, C, H, W)


if __name__ == "__main__":
    B, C, H, W = 2, 32, 16, 16

    key = jax.random.PRNGKey(0)
    kx, kt, kw, kb = jax.random.split(key, 4)

    x = jax.random.normal(kx, (B, C, H, W), dtype=jnp.float32)
    t_emb = jax.random.normal(kt, (B, C), dtype=jnp.float32)
    w = jax.random.normal(kw, (C, C), dtype=jnp.float32) * 0.1
    b = jax.random.normal(kb, (C,), dtype=jnp.float32) * 0.1

    out = jax.block_until_ready(residual_forward(x, t_emb, w, b))

    # Pure-JAX reference: fn(x, t) + x
    fn_ref = (
        jnp.einsum("bchw,cd->bdhw", x, w)
        + b[None, :, None, None]
        + t_emb[:, :, None, None]
    )
    ref = fn_ref + x

    assert out.shape == (B, C, H, W)
    assert jnp.allclose(out, ref, atol=1e-4, rtol=1e-4)
    print("KERNEL_OK")
</pallas_src>

<mosaic_0001>
module attributes {stable_mosaic.version = 11 : i64} {
  func.func @_residual_kernel(%arg0: i32, %arg1: i32, %arg2: memref<1x32x128xf32, #tpu.memory_space<vmem>>, %arg3: memref<1x32x1xf32, #tpu.memory_space<vmem>>, %arg4: memref<32x32xf32, #tpu.memory_space<vmem>>, %arg5: memref<1x32x128xf32, #tpu.memory_space<vmem>>) attributes {dimension_semantics = [#tpu.dimension_semantics<parallel>, #tpu.dimension_semantics<parallel>], iteration_bounds = array<i64: 2, 2>, scalar_prefetch = 0 : i64, scratch_operands = 0 : i64, tpu.core_type = #tpu.core_type<tc>, window_params = [{transform_indices = @transform_0, window_bounds = array<i64: 1, 32, 128>}, {transform_indices = @transform_1, window_bounds = array<i64: 1, 32, 1>}, {pipeline_mode = #tpu.pipeline_mode<synchronous>, transform_indices = @transform_2, window_bounds = array<i64: 32, 32>}, {transform_indices = @transform_3, window_bounds = array<i64: 1, 32, 128>}]} {
    %c0 = arith.constant 0 : index
    %c0_0 = arith.constant 0 : index
    %c0_1 = arith.constant 0 : index
    %0 = vector.load %arg2[%c0, %c0_0, %c0_1] : memref<1x32x128xf32, #tpu.memory_space<vmem>>, vector<1x32x128xf32>
    %1 = vector.shape_cast %0 : vector<1x32x128xf32> to vector<32x128xf32>
    %c0_2 = arith.constant 0 : index
    %c0_3 = arith.constant 0 : index
    %2 = vector.load %arg4[%c0_2, %c0_3] : memref<32x32xf32, #tpu.memory_space<vmem>>, vector<32x32xf32>
    %cst = arith.constant dense<0.000000e+00> : vector<32x128xf32>
    %3 = tpu.matmul %2, %1, %cst {dimension_numbers = #tpu.dot_dimension_numbers<[1], [0], [0], [1], [0, 0, 1, 1], [], []>} : vector<32x32xf32>, vector<32x128xf32>, vector<32x128xf32> -> vector<32x128xf32>
    %c0_4 = arith.constant 0 : index
    %c0_5 = arith.constant 0 : index
    %c0_6 = arith.constant 0 : index
    %4 = vector.load %arg3[%c0_4, %c0_5, %c0_6] : memref<1x32x1xf32, #tpu.memory_space<vmem>>, vector<1x32x1xf32>
    %5 = vector.shape_cast %4 : vector<1x32x1xf32> to vector<32x1xf32>
    %6 = vector.broadcast %5 : vector<32x1xf32> to vector<32x128xf32>
    %7 = arith.addf %3, %6 : vector<32x128xf32>
    %8 = arith.addf %7, %1 : vector<32x128xf32>
    %c0_7 = arith.constant 0 : index
    %c0_8 = arith.constant 0 : index
    %c0_9 = arith.constant 0 : index
    %9 = vector.load %arg5[%c0_7, %c0_8, %c0_9] : memref<1x32x128xf32, #tpu.memory_space<vmem>>, vector<1x32x128xf32>
    %10 = vector.shape_cast %9 : vector<1x32x128xf32> to vector<32x128xf32>
    %11 = vector.shape_cast %8 : vector<32x128xf32> to vector<1x32x128xf32>
    tpu.vector_store %arg5[%c0_7, %c0_8, %c0_9], %11 {strides = array<i32>} : memref<1x32x128xf32, #tpu.memory_space<vmem>>, vector<1x32x128xf32>,
    return
  }
  func.func @transform_0(%arg0: i32, %arg1: i32) -> (i32, i32, i32) {
    %c0_i32 = arith.constant 0 : i32
    %c0_i32_0 = arith.constant 0 : i32
    return %arg0, %c0_i32, %arg1 : i32, i32, i32
  }
  func.func @transform_1(%arg0: i32, %arg1: i32) -> (i32, i32, i32) {
    %c0_i32 = arith.constant 0 : i32
    %c0_i32_0 = arith.constant 0 : i32
    %c0_i32_1 = arith.constant 0 : i32
    return %arg0, %c0_i32, %c0_i32_0 : i32, i32, i32
  }
  func.func @transform_2(%arg0: i32, %arg1: i32) -> (i32, i32) {
    %c0_i32 = arith.constant 0 : i32
    %c0_i32_0 = arith.constant 0 : i32
    %c0_i32_1 = arith.constant 0 : i32
    return %c0_i32, %c0_i32_0 : i32, i32
  }
  func.func @transform_3(%arg0: i32, %arg1: i32) -> (i32, i32, i32) {
    %c0_i32 = arith.constant 0 : i32
    %c0_i32_0 = arith.constant 0 : i32
    return %arg0, %c0_i32, %arg1 : i32, i32, i32
  }
}

</mosaic_0001>

<llo_original>
// kernel: tpu_custom_call.1
$region0: #{tpu_custom_call.1}
  #allocation0 [shape = 'u32[]', space=smem, size = 0x4, offset = 0x4, fixed_abs, tag = 'smem constant byte address 0x4 - core index']
  #allocation1 [shape = 'u32[72,128]{1,0:T(1,128)}', space=vmem, size = 0x9000, scoped, tag = 'internal scratch']
  %s0 = inlined_call_operand.hbm [shape: f32[2,32,256], index: 0, kind: input, shape index: {}]
  %s1 = inlined_call_operand.vmem [shape: f32[2,32,1], index: 1, kind: input, shape index: {}]
  %s2 = inlined_call_operand.vmem [shape: f32[32,32], index: 2, kind: input, shape index: {}]
  %s3 = inlined_call_operand.hbm [shape: f32[2,32,256], index: 3, kind: output, shape index: {}]
  %s4 = sld [smem:[#allocation0]]
  $region49: #{tpu_custom_call.1} parent=0
    _
  %s6 = ssub.s32 1, %s4
  %s7 = scalar_select 0, %s6, %s4
  $region1: #{tpu_custom_call.1} parent=0
    #allocation2 [shape = 'u8[32768]{0}', space=vmem, size = 0x8000, scoped, tag = 'input window, operand 0']
    #allocation3 [shape = 's32[2]{0}', space=sflag, size = 0x8, scoped, tag = 'scoped memory for tpu_custom_call.1']
    #allocation4 [shape = 's32[2]{0}', space=sflag, size = 0x8, scoped, tag = 'scoped memory for tpu_custom_call.1']
    #allocation5 [shape = 'u8[32768]{0}', space=vmem, size = 0x8000, scoped, tag = 'output window, operand 0']
    %8 = vsyncpa [#allocation3], 0
    %s9 = scalar_lea.sflag [#allocation3], 1
    %10 = vsyncpa %s9, 0
    %11 = vsyncpa [#allocation4], 0
    %s12 = scalar_lea.sflag [#allocation4], 1
    %13 = vsyncpa %s12, 0
    loop: start=0, step=1, limit=6
    $region2: #{tpu_custom_call.1} parent=1 // loop_pre_header
      _
    $region3: #{tpu_custom_call.1} parent=1 // loop_header
      %s15 = sphi 0, %s19
      %p16 = scmp.ge.s32.totalorder %s15, 6
      %s22 = sphi 0, %s34
      %s23 = sphi 0, %s30
      %s24 = sphi 0, %s22
      %s25 = sphi 0, %s23
      %s26 = sphi 0, %s24
      %s27 = sphi 0, %s25
      %s39 = sphi 0, %s41
      %s42 = sphi 0, %s39
      %s43 = sphi 0, %s42
      %s59 = sphi 0, %s43
      %s65 = sphi 0, %s67
      %s68 = sphi 0, %s65
      %s69 = sphi 0, %s68
      %s85 = sphi 0, %s69
      %s89 = sphi 0, %s89
      %s91 = sphi 0, %s89
      %s92 = sphi 0, %s91
      %s106 = sphi 0, %s92
      %s114 = sphi 0, %s116
      %s117 = sphi 0, %s114
      %s118 = sphi 0, %s117
      %s134 = sphi 0, %s118
    $region4: #{tpu_custom_call.1} parent=1 // loop_header_branch
      %18 = sbr.rel (%p16) target = $region8
    $region5: #{tpu_custom_call.1} parent=1 // loop_body
      %s20 = ssub.s32 %s15, 1
      %s21 = ssub.s32 %s15, 2
      %s28 = sadd.s32 1, %s23
      %p29 = scmp.ge.s32.totalorder %s28, 2
      %s30 = scalar_select %p29, 0, %s28
      %s31 = sadd.s32 1, %s22
      %s32 = scalar_select %p29, %s31, %s22
      %p33 = scmp.ge.s32.totalorder %s32, 2
      %s34 = scalar_select %p33, 0, %s32
      %s35 = ssub.s32 %s22, %s34
      %s36 = ssub.s32 %s23, %s30
      %s37 = sor.u32 %s35, %s36
      %p38 = scmp.eq.s32.totalorder %s37, 0
      %s40 = sadd.s32 %s39, 1
      %s41 = scalar_select %p38, %s39, %s40
      %p44 = pneg %p38
      %p45 = scmp.eq.s32.totalorder %s15, 3
      %p46 = por %p44, %p45
      %p47 = scmp.ne.s32.totalorder %s39, %s42
      %p48 = scmp.eq.s32.totalorder %s15, 0
      %p49 = por %p47, %p48
      %p50 = scmp.ne.s32.totalorder %s39, %s42
      %p51 = scmp.eq.s32.totalorder %s20, 3
      %p52 = por %p50, %p51
      %p53 = scmp.ne.s32.totalorder %s42, %s43
      %p54 = scmp.eq.s32.totalorder %s20, 0
      %p55 = por %p53, %p54
      %p56 = scmp.ne.s32.totalorder %s42, %s43
      %p57 = scmp.eq.s32.totalorder %s21, 3
      %p58 = por %p56, %p57
      %p60 = scmp.ne.s32.totalorder %s43, %s59
      %p61 = scmp.eq.s32.totalorder %s21, 0
      %p62 = por %p60, %p61
      %s63 = ssub.s32 %s22, %s34
      %p64 = scmp.eq.s32.totalorder %s63, 0
      %s66 = sadd.s32 %s65, 1
      %s67 = scalar_select %p64, %s65, %s66
      %p70 = pneg %p64
      %p71 = scmp.eq.s32.totalorder %s15, 3
      %p72 = por %p70, %p71
      %p73 = scmp.ne.s32.totalorder %s65, %s68
      %p74 = scmp.eq.s32.totalorder %s15, 0
      %p75 = por %p73, %p74
      %p76 = scmp.ne.s32.totalorder %s65, %s68
      %p77 = scmp.eq.s32.totalorder %s20, 3
      %p78 = por %p76, %p77
      %p79 = scmp.ne.s32.totalorder %s68, %s69
      %p80 = scmp.eq.s32.totalorder %s20, 0
      %p81 = por %p79, %p80
      %p82 = scmp.ne.s32.totalorder %s68, %s69
      %p83 = scmp.eq.s32.totalorder %s21, 3
      %p84 = por %p82, %p83
      %p86 = scmp.ne.s32.totalorder %s69, %s85
      %p87 = scmp.eq.s32.totalorder %s21, 0
      %p88 = por %p86, %p87
      %s90 = sadd.s32 %s89, 1
      %p93 = scmp.eq.s32.totalorder %s15, 3
      %p94 = scmp.ne.s32.totalorder %s89, %s91
      %p95 = scmp.eq.s32.totalorder %s15, 0
      %p96 = por %p94, %p95
      %p97 = scmp.ne.s32.totalorder %s89, %s91
      %p98 = scmp.eq.s32.totalorder %s20, 3
      %p99 = por %p97, %p98
      %p100 = scmp.ne.s32.totalorder %s91, %s92
      %p101 = scmp.eq.s32.totalorder %s20, 0
      %p102 = por %p100, %p101
      %p103 = scmp.ne.s32.totalorder %s91, %s92
      %p104 = scmp.eq.s32.totalorder %s21, 3
      %p105 = por %p103, %p104
      %p107 = scmp.ne.s32.totalorder %s92, %s106
      %p108 = scmp.eq.s32.totalorder %s21, 0
      %p109 = por %p107, %p108
      %s110 = ssub.s32 %s22, %s34
      %s111 = ssub.s32 %s23, %s30
      %s112 = sor.u32 %s110, %s111
      %p113 = scmp.eq.s32.totalorder %s112, 0
      %s115 = sadd.s32 %s114, 1
      %s116 = scalar_select %p113, %s114, %s115
      %p119 = pneg %p113
      %p120 = scmp.eq.s32.totalorder %s15, 3
      %p121 = por %p119, %p120
      %p122 = scmp.ne.s32.totalorder %s114, %s117
      %p123 = scmp.eq.s32.totalorder %s15, 0
      %p124 = por %p122, %p123
      %p125 = scmp.ne.s32.totalorder %s114, %s117
      %p126 = scmp.eq.s32.totalorder %s20, 3
      %p127 = por %p125, %p126
      %p128 = scmp.ne.s32.totalorder %s117, %s118
      %p129 = scmp.eq.s32.totalorder %s20, 0
      %p130 = por %p128, %p129
      %p131 = scmp.ne.s32.totalorder %s117, %s118
      %p132 = scmp.eq.s32.totalorder %s21, 3
      %p133 = por %p131, %p132
      %p135 = scmp.ne.s32.totalorder %s118, %s134
      %p136 = scmp.eq.s32.totalorder %s21, 0
      %p137 = por %p135, %p136
      %p138 = scmp.le.s32.totalorder 1, %s15
      %p139 = scmp.lt.s32.totalorder %s15, 5
      %p140 = pnand %p138, %p139
      %p141 = pneg %p140
      // Predicated region
      $region9: #{tpu_custom_call.1} parent=5 // pred_check
        _
      $region10: #{tpu_custom_call.1} parent=5 // pred_check_branch
        %143 = sbr.rel (%p140) target = $region12
      $region11: #{tpu_custom_call.1} parent=5 // pred_region
        %s144 = ssub.s32 %s15, 1
        // Predicated region
        $region13: #{tpu_custom_call.1} parent=11 // pred_check
          %p145 = pneg %p102
        $region14: #{tpu_custom_call.1} parent=11 // pred_check_branch
          %147 = sbr.rel (%p145) target = $region16
        $region15: #{tpu_custom_call.1} parent=11 // pred_region
          _
        $region16: #{tpu_custom_call.1} parent=11 // pred_fallthru
          _
      $region12: #{tpu_custom_call.1} parent=5 // pred_fallthru
        _
      %p148 = scmp.lt.s32.totalorder %s15, 4
      // Predicated region
      $region17: #{tpu_custom_call.1} parent=5 // pred_check
        %p149 = pneg %p148
      $region18: #{tpu_custom_call.1} parent=5 // pred_check_branch
        %151 = sbr.rel (%p149) target = $region20
      $region19: #{tpu_custom_call.1} parent=5 // pred_region
        // Predicated region
        $region21: #{tpu_custom_call.1} parent=19 // pred_check
          %p152 = pneg %p49
        $region22: #{tpu_custom_call.1} parent=19 // pred_check_branch
          %154 = sbr.rel (%p152) target = $region24
        $region23: #{tpu_custom_call.1} parent=19 // pred_region
          %s155 = sand.u32 %s39, 1
          %s156 = scalar_lea.sflag [#allocation3], %s155
          %s157 = sand.u32 %s39, 1
          %s158 = smul.addr %s157, 32
          %s159 = scalar_lea.vmem [#allocation2], %s158
          %161 = vsyncadd %s156, 0
          %s162 = smul.addr %s22, 8
          %s163 = sadd.s32 %s23, %s162
          %s164 = smul.addr %s163, 8
          %s165 = scalar_lea.hbm %s0, %s164
          %s166 = sshll.u32 %s165, 4
          %s167 = int_to_ptr.hbm [resolvable:$true] %s166
          %s168 = sshll.u32 %s159, 4
          %s169 = int_to_ptr.vmem [resolvable:$true] %s168
          %174 = dma.hbm_to_vmem [thread:$0]  %s167, 512, %s169, %s156, 256, 128, 8
        $region24: #{tpu_custom_call.1} parent=19 // pred_fallthru
          _
        // Predicated region
        $region25: #{tpu_custom_call.1} parent=19 // pred_check
          %p175 = pneg %p75
        $region26: #{tpu_custom_call.1} parent=19 // pred_check_branch
          %177 = sbr.rel (%p175) target = $region28
        $region27: #{tpu_custom_call.1} parent=19 // pred_region
          %p178 = scmp.lt.s32.totalorder %s22, 1
          %s179 = scalar_select %p178, %s22, 1
          %s180 = smul.addr %s179, 4
          %s181 = smul.addr %s180, 8
          %s182 = scalar_lea.vmem %s1, %s181
        $region28: #{tpu_custom_call.1} parent=19 // pred_fallthru
          _
      $region20: #{tpu_custom_call.1} parent=5 // pred_fallthru
        _
      %p183 = scmp.le.s32.totalorder 1, %s15
      %p184 = scmp.lt.s32.totalorder %s15, 5
      %p185 = pnand %p183, %p184
      %p186 = pneg %p185
      // Predicated region
      $region29: #{tpu_custom_call.1} parent=5 // pred_check
        _
      $region30: #{tpu_custom_call.1} parent=5 // pred_check_branch
        %188 = sbr.rel (%p185) target = $region32
      $region31: #{tpu_custom_call.1} parent=5 // pred_region
        %s189 = ssub.s32 %s15, 1
        %s190 = sand.u32 %s42, 1
        %s191 = scalar_lea.sflag [#allocation3], %s190
        %s192 = sand.u32 %s42, 1
        %s193 = smul.addr %s192, 32
        %s194 = scalar_lea.vmem [#allocation2], %s193
        // Predicated region
        $region33: #{tpu_custom_call.1} parent=31 // pred_check
          %p195 = pneg %p55
        $region34: #{tpu_custom_call.1} parent=31 // pred_check_branch
          %197 = sbr.rel (%p195) target = $region36
        $region35: #{tpu_custom_call.1} parent=31 // pred_region
          %199 = dma.done %s191, 512
        $region36: #{tpu_custom_call.1} parent=31 // pred_fallthru
          _
        %s200 = sand.u32 %s42, 1
        %s201 = scalar_lea.sflag [#allocation3], %s200
        %s202 = sand.u32 %s42, 1
        %s203 = smul.addr %s202, 32
        %s204 = scalar_lea.vmem [#allocation2], %s203
        %p205 = pneg %p55
        %p206 = pneg %p52
        %p207 = scmp.lt.s32.totalorder %s24, 1
        %s208 = scalar_select %p207, %s24, 1
        %s209 = smul.addr %s208, 4
        %s210 = smul.addr %s209, 8
        %s211 = scalar_lea.vmem %s1, %s210
        %p212 = pneg %p81
        %p213 = pneg %p78
        %p214 = pneg %p102
        %p215 = pneg %p99
        %p216 = pneg %p130
        %p217 = pneg %p127
        %s218 = sand.u32 %s117, 1
        %s219 = scalar_lea.sflag [#allocation4], %s218
        %s220 = sand.u32 %s117, 1
        %s221 = smul.addr %s220, 32
        %s222 = scalar_lea.vmem [#allocation5], %s221
        %p223 = scmp.lt.s32.totalorder %s24, 1
        %s224 = scalar_select %p223, %s24, 1
        %s225 = smul.addr %s224, 4
        %s226 = smul.addr %s225, 8
        %s227 = scalar_lea.vmem %s1, %s226
        %v228 = vld [vmem:[%s194] sm:$0xff]
        %v229 = vld [vmem:[%s194 + $0x8] sm:$0xff]
        %v230 = vld [vmem:[%s194 + $0x10] sm:$0xff]
        %v231 = vld [vmem:[%s194 + $0x18] sm:$0xff]
        %v232 = vld [vmem:[%s2] sm:$0xff]
        %v233 = vld [vmem:[%s2 + $0x8] sm:$0xff]
        %v234 = vld [vmem:[%s2 + $0x10] sm:$0xff]
        %v235 = vld [vmem:[%s2 + $0x18] sm:$0xff]
        %v236 = vld [vmem:[%s227] sm:$0xff]
        %v237 = vld [vmem:[%s227 + $0x8] sm:$0xff]
        %v238 = vld [vmem:[%s227 + $0x10] sm:$0xff]
        %v239 = vld [vmem:[%s227 + $0x18] sm:$0xff]
        %241 = vset.pattern.permute.xlu0 0
        %242 = vperm.xlu0 %241, %v236
        %v243 = vpop.permute.xlu0 %242
        %246 = vset.pattern.permute.xlu0 0
        %247 = vperm.xlu0 %246, %v237
        %v248 = vpop.permute.xlu0 %247
        %251 = vset.pattern.permute.xlu0 0
        %252 = vperm.xlu0 %251, %v238
        %v253 = vpop.permute.xlu0 %252
        %256 = vset.pattern.permute.xlu0 0
        %257 = vperm.xlu0 %256, %v239
        %v258 = vpop.permute.xlu0 %257
        %vm260 = vcmask 261120
        %v262 = vsel %vm260, %v232, 0
        %v265 = vsel %vm260, %v233, 0
        %v268 = vsel %vm260, %v234, 0
        %v271 = vsel %vm260, %v235, 0
        %273 = vmatpush.msra.mxu0 0.0
        %274 = vmatpush.msra.mxu0 0.0
        %275 = vmatpush.msra.mxu0 0.0
        %276 = vmatpush.msra.mxu0 0.0
        %277 = vmatpush.msra.mxu0 0.0
        %278 = vmatpush.msra.mxu0 0.0
        %279 = vmatpush.msra.mxu0 0.0
        %280 = vmatpush.msra.mxu0 0.0
        %281 = vmatpush.msra.mxu0 0.0
        %282 = vmatpush.msra.mxu0 0.0
        %283 = vmatpush.msra.mxu0 0.0
        %284 = vmatpush.msra.mxu0 0.0
        %285 = vmatpush.msra.mxu0 %v231
        %286 = vmatpush.msra.mxu0 %v230
        %287 = vmatpush.msra.mxu0 %v229
        %288 = vmatpush.msra.mxu0 %v228
        %289 = vmatmul.f32.gmra.mxu0 %v262
        %v290 = vpop.f32.mrf.mxu0
        %v291 = vadd.f32 %v243, %v290
        %292 = vmatmul.f32.gmra.mxu0 %v265
        %v293 = vpop.f32.mrf.mxu0
        %v294 = vadd.f32 %v248, %v293
        %295 = vmatmul.f32.gmra.mxu0 %v268
        %v296 = vpop.f32.mrf.mxu0
        %v297 = vadd.f32 %v253, %v296
        %298 = vmatmul.f32.gmra.mxu0 %v271
        %v299 = vpop.f32.mrf.mxu0
        %v300 = vadd.f32 %v258, %v299
        %301 = vdwg.mxu0
        %v302 = vadd.f32 %v291, %v228
        %v303 = vadd.f32 %v294, %v229
        %v304 = vadd.f32 %v297, %v230
        %v305 = vadd.f32 %v300, %v231
        %306 = vst [vmem:[%s222] sm:$0xff] %v302
        %307 = vst [vmem:[%s222 + $0x8] sm:$0xff] %v303
        %308 = vst [vmem:[%s222 + $0x10] sm:$0xff] %v304
        %309 = vst [vmem:[%s222 + $0x18] sm:$0xff] %v305
        %s310 = sand.u32 %s117, 1
        %s311 = scalar_lea.sflag [#allocation4], %s310
        %s312 = sand.u32 %s117, 1
        %s313 = smul.addr %s312, 32
        %s314 = scalar_lea.vmem [#allocation5], %s313
        // Predicated region
        $region37: #{tpu_custom_call.1} parent=31 // pred_check
          %p315 = pneg %p127
        $region38: #{tpu_custom_call.1} parent=31 // pred_check_branch
          %317 = sbr.rel (%p315) target = $region40
        $region39: #{tpu_custom_call.1} parent=31 // pred_region
          %319 = vsyncadd %s311, 0
          %s320 = smul.addr %s24, 8
          %s321 = sadd.s32 %s25, %s320
          %s322 = smul.addr %s321, 8
          %s323 = scalar_lea.hbm %s3, %s322
          %s324 = sshll.u32 %s314, 4
          %s325 = int_to_ptr.vmem [resolvable:$true] %s324
          %s326 = sshll.u32 %s323, 4
          %s327 = int_to_ptr.hbm [resolvable:$true] %s326
          %332 = dma.vmem_to_hbm [thread:$0]  %s325, 512, %s327, %s311, 128, 256, 8
        $region40: #{tpu_custom_call.1} parent=31 // pred_fallthru
          _
      $region32: #{tpu_custom_call.1} parent=5 // pred_fallthru
        _
      %p333 = scmp.le.s32.totalorder 2, %s15
      // Predicated region
      $region41: #{tpu_custom_call.1} parent=5 // pred_check
        %p334 = pneg %p333
      $region42: #{tpu_custom_call.1} parent=5 // pred_check_branch
        %336 = sbr.rel (%p334) target = $region44
      $region43: #{tpu_custom_call.1} parent=5 // pred_region
        %s337 = ssub.s32 %s15, 2
        // Predicated region
        $region45: #{tpu_custom_call.1} parent=43 // pred_check
          %p338 = pneg %p133
        $region46: #{tpu_custom_call.1} parent=43 // pred_check_branch
          %340 = sbr.rel (%p338) target = $region48
        $region47: #{tpu_custom_call.1} parent=43 // pred_region
          %s341 = sand.u32 %s118, 1
          %s342 = scalar_lea.sflag [#allocation4], %s341
          %s343 = sand.u32 %s118, 1
          %s344 = smul.addr %s343, 32
          %s345 = scalar_lea.vmem [#allocation5], %s344
          %347 = dma.done %s342, 512
        $region48: #{tpu_custom_call.1} parent=43 // pred_fallthru
          _
      $region44: #{tpu_custom_call.1} parent=5 // pred_fallthru
        _
    $region6: #{tpu_custom_call.1} parent=1 // loop_footer
      %s19 = sadd.s32 1, %s15
    $region7: #{tpu_custom_call.1} parent=1 // loop_footer_branch
      %14 = sbr.rel target = $region3
    $region8: #{tpu_custom_call.1} parent=1 // loop_exit
      _
    %348 = vsyncpa [#allocation3], 1
    %s349 = scalar_lea.sflag [#allocation3], 1
    %350 = vsyncpa %s349, 1
    %351 = vsyncpa [#allocation4], 1
    %s352 = scalar_lea.sflag [#allocation4], 1
    %353 = vsyncpa %s352, 1

</llo_original>
